<compile_context>
chip_gen: v6e
topology: v6e:2x2x1
jax: 0.10.0
libtpu: 0.0.40
codegen_flags: <defaults>
</compile_context>

<pallas_src>
import functools

import jax
import jax.numpy as jnp
from jax import lax
from jax.experimental import pallas as pl
from jax.experimental.pallas import tpu as pltpu


# ----------------------------------------------------------------------------
# In-kernel polyphase conv for one (batch, row-block) tile
# ----------------------------------------------------------------------------
def _conv_tile(x_ref, w_ref, row_tile, width):
    """x_ref: (H+2, W+2, Cin) padded original-resolution input (one batch elem)
       w_ref: (9*Cin, 4*Cout) folded polyphase weights
       returns (row_tile*W, 4*Cout) float32; rows are (p, q) row-major over the
       original-resolution tile, columns are phase*(Cout)+cout, phase = a*2+b.
    """
    cin = x_ref.shape[-1]
    r = pl.program_id(1)
    row0 = pl.multiple_of(r * row_tile, row_tile)
    xt = x_ref[pl.ds(row0, row_tile + 2), :, :]          # (TR+2, W+2, Cin)

    # im2col of the 3x3 neighborhood, built once per tile -> single MXU matmul.
    cols = []
    for dy in range(3):
        for dx in range(3):
            cols.append(
                xt[dy:dy + row_tile, dx:dx + width, :].reshape(row_tile * width, cin))
    patch = jnp.concatenate(cols, axis=1)                # (TR*W, 9*Cin)
    return jnp.dot(patch, w_ref[...], preferred_element_type=jnp.float32)


def _stats_kernel(x_ref, w_ref, sums_ref, *, row_tile, width):
    # Pass 1: per-tile partial sums / sums-of-squares of the conv output.
    conv = _conv_tile(x_ref, w_ref, row_tile, width)     # (TR*W, 4*Cout) f32
    sums_ref[0:1, :] = jnp.sum(conv, axis=0, keepdims=True)
    sums_ref[1:2, :] = jnp.sum(conv * conv, axis=0, keepdims=True)


def _bn_lrelu_kernel(x_ref, w_ref, scale_ref, shift_ref, o_ref, *, row_tile, width):
    # Pass 2: recompute the conv tile, apply affine BN + LeakyReLU(0.02).
    conv = _conv_tile(x_ref, w_ref, row_tile, width)     # (TR*W, 4*Cout) f32
    y = conv * scale_ref[...] + shift_ref[...]
    o_ref[...] = jnp.where(y >= 0, y, 0.02 * y).astype(o_ref.dtype)


# ----------------------------------------------------------------------------
# Wrapper-side helpers
# ----------------------------------------------------------------------------
def _fold_polyphase_weights(w_oihw, dtype):
    """torch Conv2d weight (Cout, Cin, 3, 3) -> polyphase matrix (9*Cin, 4*Cout).

    Row index  = (dy*3 + dx)*Cin + ci   (tap of the 3x3 window on the padded
                                         ORIGINAL-resolution image)
    Col index  = (a*2 + b)*Cout + co    (sub-pixel phase (a, b) of the x2 output)
    """
    cout, cin = int(w_oihw.shape[0]), int(w_oihw.shape[1])
    w_t = jnp.transpose(w_oihw, (2, 3, 1, 0)).astype(jnp.float32)  # (ky,kx,Cin,Cout)
    wb = jnp.zeros((9, cin, 4, cout), jnp.float32)
    for a in range(2):
        for b in range(2):
            for ky in range(3):
                for kx in range(3):
                    dy = (a + ky - 1) // 2 + 1   # nearest-x2: which original row
                    dx = (b + kx - 1) // 2 + 1   # / col this upsampled tap reads
                    wb = wb.at[dy * 3 + dx, :, a * 2 + b, :].add(w_t[ky, kx])
    return wb.reshape(9 * cin, 4 * cout).astype(dtype)


def _pick_row_tile(h, w, c4, budget_bytes=2 << 20):
    legal = [tr for tr in range(1, h + 1)
             if h % tr == 0 and ((tr * w) % 8 == 0 or tr == h)]
    fitting = [tr for tr in legal if tr * w * c4 * 4 <= budget_bytes]
    return max(fitting) if fitting else min(legal)


def upsampling_forward(x_nchw, w_oihw, gamma, beta, *,
                       row_tile=None, compute_dtype=jnp.bfloat16, eps=1e-5):
    """(N, Cin, H, W) -> (N, Cout, 2H, 2W), matching the torch module forward."""
    n, cin, h, w = (int(d) for d in x_nchw.shape)
    cout = int(w_oihw.shape[0])
    c4 = 4 * cout

    if row_tile is None:
        row_tile = _pick_row_tile(h, w, c4)
    assert h % row_tile == 0
    assert (row_tile * w) % 8 == 0 or row_tile == h
    r_blocks = h // row_tile

    # NCHW -> NHWC + zero-pad by 1 at ORIGINAL resolution (tiny; the x2 upsample
    # itself lives inside the folded weights and is never materialized).
    x_pad = jnp.pad(jnp.transpose(x_nchw, (0, 2, 3, 1)),
                    ((0, 0), (1, 1), (1, 1), (0, 0))).astype(compute_dtype)
    w_poly = _fold_polyphase_weights(w_oihw, compute_dtype)        # (9*Cin, 4*Cout)

    grid = (n, r_blocks)
    x_spec = pl.BlockSpec((None, h + 2, w + 2, cin), lambda i, r: (i, 0, 0, 0))
    w_spec = pl.BlockSpec((9 * cin, c4), lambda i, r: (0, 0))
    cparams = pltpu.CompilerParams(
        dimension_semantics=("parallel", "parallel"),
        vmem_limit_bytes=48 * 1024 * 1024)

    # --- pass 1: partial batch statistics of the conv output -----------------
    stats = pl.pallas_call(
        functools.partial(_stats_kernel, row_tile=row_tile, width=w),
        grid=grid,
        in_specs=[x_spec, w_spec],
        out_specs=pl.BlockSpec((None, None, 2, c4), lambda i, r: (i, r, 0, 0)),
        out_shape=jax.ShapeDtypeStruct((n, r_blocks, 2, c4), jnp.float32),
        compiler_params=cparams,
    )(x_pad, w_poly)

    tot = jnp.sum(stats, axis=(0, 1))                    # (2, 4*Cout)
    count = float(n * h * w * 4)                         # = N * (2H) * (2W)
    s = jnp.sum(tot[0].reshape(4, cout), axis=0)         # fold the 4 phases
    ss = jnp.sum(tot[1].reshape(4, cout), axis=0)
    mean = s / count
    var = jnp.maximum(ss / count - mean * mean, 0.0)     # biased batch variance
    scale_c = gamma.astype(jnp.float32) * lax.rsqrt(var + eps)
    shift_c = beta.astype(jnp.float32) - mean * scale_c
    scale4 = jnp.tile(scale_c, 4).reshape(1, c4)         # per phase*Cout column
    shift4 = jnp.tile(shift_c, 4).reshape(1, c4)

    # --- pass 2: conv (recomputed) + affine BN + LeakyReLU, tiled -------------
    vec_spec = pl.BlockSpec((1, c4), lambda i, r: (0, 0))
    out = pl.pallas_call(
        functools.partial(_bn_lrelu_kernel, row_tile=row_tile, width=w),
        grid=grid,
        in_specs=[x_spec, w_spec, vec_spec, vec_spec],
        out_specs=pl.BlockSpec((None, row_tile * w, c4), lambda i, r: (i, r, 0)),
        out_shape=jax.ShapeDtypeStruct((n, h * w, c4), jnp.float32),
        compiler_params=cparams,
    )(x_pad, w_poly, scale4, shift4)

    # Pixel-shuffle (interleave the 4 phases) + NCHW, fused into the single
    # transpose the torch layout contract forces anyway.
    out = out.reshape(n, h, w, 2, 2, cout)               # (n, p, q, a, b, c)
    out = jnp.transpose(out, (0, 5, 1, 3, 2, 4))         # (n, c, p, a, q, b)
    return out.reshape(n, cout, 2 * h, 2 * w)


# ----------------------------------------------------------------------------
# Pure-JAX reference of the same forward pass (sanity check)
# ----------------------------------------------------------------------------
def _reference(x_nchw, w_oihw, gamma, beta, eps=1e-5):
    x = jnp.transpose(x_nchw, (0, 2, 3, 1))
    x = jnp.repeat(jnp.repeat(x, 2, axis=1), 2, axis=2)
    w_hwio = jnp.transpose(w_oihw, (2, 3, 1, 0))
    y = lax.conv_general_dilated(x, w_hwio, window_strides=(1, 1), padding="SAME",
                                 dimension_numbers=("NHWC", "HWIO", "NHWC"))
    mean = jnp.mean(y, axis=(0, 1, 2), keepdims=True)
    var = jnp.mean(jnp.square(y - mean), axis=(0, 1, 2), keepdims=True)
    y = (y - mean) * lax.rsqrt(var + eps) * gamma + beta
    y = jnp.where(y >= 0, y, 0.02 * y)
    return jnp.transpose(y, (0, 3, 1, 2))


if __name__ == "__main__":
    key = jax.random.PRNGKey(0)
    k1, k2 = jax.random.split(key)

    N, Cin, Cout, H, W = 2, 4, 8, 16, 16
    x = jax.random.normal(k1, (N, Cin, H, W), dtype=jnp.float32)
    w = jax.random.normal(k2, (Cout, Cin, 3, 3), dtype=jnp.float32) * 0.1
    gamma = jnp.ones((Cout,), jnp.float32)   # BatchNorm2d default init
    beta = jnp.zeros((Cout,), jnp.float32)

    ref = _reference(x, w, gamma, beta)

    # Exact-math configuration (f32 MXU path): validates the polyphase fold,
    # tiling and indexing tightly against the dense reference.
    out_f32 = jax.block_until_ready(
        upsampling_forward(x, w, gamma, beta, row_tile=8,
                           compute_dtype=jnp.float32))
    assert out_f32.shape == (N, Cout, 2 * H, 2 * W), out_f32.shape
    err_f32 = float(jnp.max(jnp.abs(out_f32 - ref)))
    assert jnp.allclose(out_f32, ref, atol=2e-3, rtol=2e-3), err_f32

    # Performance configuration: bf16 MXU operands, f32 accumulation.
    out_bf16 = jax.block_until_ready(
        upsampling_forward(x, w, gamma, beta, row_tile=8,
                           compute_dtype=jnp.bfloat16))
    err_bf16 = float(jnp.max(jnp.abs(out_bf16 - ref)))
    assert jnp.allclose(out_bf16, ref, atol=8e-2, rtol=8e-2), err_bf16

    print("KERNEL_OK")
</pallas_src>

<mosaic_0001>
module attributes {stable_mosaic.version = 11 : i64} {
  func.func @_stats_kernel(%arg0: i32, %arg1: i32, %arg2: memref<1x18x18x4xf32, #tpu.memory_space<vmem>>, %arg3: memref<36x32xf32, #tpu.memory_space<vmem>>, %arg4: memref<1x1x2x32xf32, #tpu.memory_space<vmem>>) attributes {dimension_semantics = [#tpu.dimension_semantics<parallel>, #tpu.dimension_semantics<parallel>], iteration_bounds = array<i64: 2, 2>, scalar_prefetch = 0 : i64, scratch_operands = 0 : i64, tpu.core_type = #tpu.core_type<tc>, window_params = [{transform_indices = @transform_0, window_bounds = array<i64: 1, 18, 18, 4>}, {pipeline_mode = #tpu.pipeline_mode<synchronous>, transform_indices = @transform_1, window_bounds = array<i64: 36, 32>}, {transform_indices = @transform_2, window_bounds = array<i64: 1, 1, 2, 32>}]} {
    %c8_i32 = arith.constant 8 : i32
    %0 = arith.muli %arg1, %c8_i32 : i32
    %1 = tpu.assume_multiple %0, 8 : i32
    %c0 = arith.constant 0 : index
    %2 = arith.index_cast %1 : i32 to index
    %c0_0 = arith.constant 0 : index
    %c0_1 = arith.constant 0 : index
    %3 = vector.load %arg2[%c0, %2, %c0_0, %c0_1] : memref<1x18x18x4xf32, #tpu.memory_space<vmem>>, vector<1x10x18x4xf32>
    %4 = vector.shape_cast %3 : vector<1x10x18x4xf32> to vector<10x18x4xf32>
    %5 = vector.extract_strided_slice %4 {offsets = [0, 0, 0], sizes = [8, 16, 4], strides = [1, 1, 1]} : vector<10x18x4xf32> to vector<8x16x4xf32>
    %6 = vector.shape_cast %5 : vector<8x16x4xf32> to vector<128x4xf32>
    %7 = vector.extract_strided_slice %4 {offsets = [0, 1, 0], sizes = [8, 16, 4], strides = [1, 1, 1]} : vector<10x18x4xf32> to vector<8x16x4xf32>
    %8 = vector.shape_cast %7 : vector<8x16x4xf32> to vector<128x4xf32>
    %9 = vector.extract_strided_slice %4 {offsets = [0, 2, 0], sizes = [8, 16, 4], strides = [1, 1, 1]} : vector<10x18x4xf32> to vector<8x16x4xf32>
    %10 = vector.shape_cast %9 : vector<8x16x4xf32> to vector<128x4xf32>
    %11 = vector.extract_strided_slice %4 {offsets = [1, 0, 0], sizes = [8, 16, 4], strides = [1, 1, 1]} : vector<10x18x4xf32> to vector<8x16x4xf32>
    %12 = vector.shape_cast %11 : vector<8x16x4xf32> to vector<128x4xf32>
    %13 = vector.extract_strided_slice %4 {offsets = [1, 1, 0], sizes = [8, 16, 4], strides = [1, 1, 1]} : vector<10x18x4xf32> to vector<8x16x4xf32>
    %14 = vector.shape_cast %13 : vector<8x16x4xf32> to vector<128x4xf32>
    %15 = vector.extract_strided_slice %4 {offsets = [1, 2, 0], sizes = [8, 16, 4], strides = [1, 1, 1]} : vector<10x18x4xf32> to vector<8x16x4xf32>
    %16 = vector.shape_cast %15 : vector<8x16x4xf32> to vector<128x4xf32>
    %17 = vector.extract_strided_slice %4 {offsets = [2, 0, 0], sizes = [8, 16, 4], strides = [1, 1, 1]} : vector<10x18x4xf32> to vector<8x16x4xf32>
    %18 = vector.shape_cast %17 : vector<8x16x4xf32> to vector<128x4xf32>
    %19 = vector.extract_strided_slice %4 {offsets = [2, 1, 0], sizes = [8, 16, 4], strides = [1, 1, 1]} : vector<10x18x4xf32> to vector<8x16x4xf32>
    %20 = vector.shape_cast %19 : vector<8x16x4xf32> to vector<128x4xf32>
    %21 = vector.extract_strided_slice %4 {offsets = [2, 2, 0], sizes = [8, 16, 4], strides = [1, 1, 1]} : vector<10x18x4xf32> to vector<8x16x4xf32>
    %22 = vector.shape_cast %21 : vector<8x16x4xf32> to vector<128x4xf32>
    %23 = tpu.concatenate %6, %8, %10, %12, %14, %16, %18, %20, %22 in 1 : vector<128x4xf32>, vector<128x4xf32>, vector<128x4xf32>, vector<128x4xf32>, vector<128x4xf32>, vector<128x4xf32>, vector<128x4xf32>, vector<128x4xf32>, vector<128x4xf32> -> vector<128x36xf32>
    %c0_2 = arith.constant 0 : index
    %c0_3 = arith.constant 0 : index
    %24 = vector.load %arg3[%c0_2, %c0_3] : memref<36x32xf32, #tpu.memory_space<vmem>>, vector<36x32xf32>
    %cst = arith.constant dense<0.000000e+00> : vector<128x32xf32>
    %25 = tpu.matmul %23, %24, %cst {dimension_numbers = #tpu.dot_dimension_numbers<[1], [0], [0], [1], [0, 0, 1, 1], [], []>} : vector<128x36xf32>, vector<36x32xf32>, vector<128x32xf32> -> vector<128x32xf32>
    %cst_4 = arith.constant dense<0.000000e+00> : vector<32xf32>
    %26 = vector.multi_reduction <add>, %25, %cst_4 [0] : vector<128x32xf32> to vector<32xf32>
    %27 = vector.shape_cast %26 : vector<32xf32> to vector<1x32xf32>
    %c0_5 = arith.constant 0 : index
    %c0_6 = arith.constant 0 : index
    %c0_7 = arith.constant 0 : index
    %c0_8 = arith.constant 0 : index
    %28 = vector.load %arg4[%c0_5, %c0_6, %c0_7, %c0_8] : memref<1x1x2x32xf32, #tpu.memory_space<vmem>>, vector<1x1x1x32xf32>
    %29 = vector.shape_cast %28 : vector<1x1x1x32xf32> to vector<1x32xf32>
    %30 = vector.shape_cast %27 : vector<1x32xf32> to vector<1x1x1x32xf32>
    tpu.vector_store %arg4[%c0_5, %c0_6, %c0_7, %c0_8], %30 {strides = array<i32>} : memref<1x1x2x32xf32, #tpu.memory_space<vmem>>, vector<1x1x1x32xf32>,
    %31 = arith.mulf %25, %25 : vector<128x32xf32>
    %cst_9 = arith.constant dense<0.000000e+00> : vector<32xf32>
    %32 = vector.multi_reduction <add>, %31, %cst_9 [0] : vector<128x32xf32> to vector<32xf32>
    %33 = vector.shape_cast %32 : vector<32xf32> to vector<1x32xf32>
    %c0_10 = arith.constant 0 : index
    %c0_11 = arith.constant 0 : index
    %c1 = arith.constant 1 : index
    %c0_12 = arith.constant 0 : index
    %34 = vector.load %arg4[%c0_10, %c0_11, %c1, %c0_12] : memref<1x1x2x32xf32, #tpu.memory_space<vmem>>, vector<1x1x1x32xf32>
    %35 = vector.shape_cast %34 : vector<1x1x1x32xf32> to vector<1x32xf32>
    %36 = vector.shape_cast %33 : vector<1x32xf32> to vector<1x1x1x32xf32>
    tpu.vector_store %arg4[%c0_10, %c0_11, %c1, %c0_12], %36 {strides = array<i32>} : memref<1x1x2x32xf32, #tpu.memory_space<vmem>>, vector<1x1x1x32xf32>,
    return
  }
  func.func @transform_0(%arg0: i32, %arg1: i32) -> (i32, i32, i32, i32) {
    %c0_i32 = arith.constant 0 : i32
    %c0_i32_0 = arith.constant 0 : i32
    %c0_i32_1 = arith.constant 0 : i32
    %c0_i32_2 = arith.constant 0 : i32
    return %arg0, %c0_i32, %c0_i32_0, %c0_i32_1 : i32, i32, i32, i32
  }
  func.func @transform_1(%arg0: i32, %arg1: i32) -> (i32, i32) {
    %c0_i32 = arith.constant 0 : i32
    %c0_i32_0 = arith.constant 0 : i32
    %c0_i32_1 = arith.constant 0 : i32
    return %c0_i32, %c0_i32_0 : i32, i32
  }
  func.func @transform_2(%arg0: i32, %arg1: i32) -> (i32, i32, i32, i32) {
    %c0_i32 = arith.constant 0 : i32
    %c0_i32_0 = arith.constant 0 : i32
    %c0_i32_1 = arith.constant 0 : i32
    return %arg0, %arg1, %c0_i32, %c0_i32_0 : i32, i32, i32, i32
  }
}

</mosaic_0001>

<llo_original>
// kernel: tpu_custom_call.1
$region0: #{tpu_custom_call.1}
  #allocation0 [shape = 'u32[]', space=smem, size = 0x4, offset = 0x4, fixed_abs, tag = 'smem constant byte address 0x4 - core index']
  #allocation1 [shape = 'u32[144,128]{1,0:T(1,128)}', space=vmem, size = 0x12000, scoped, tag = 'internal scratch']
  %s0 = inlined_call_operand.vmem [shape: f32[2,18,18,4], index: 0, kind: input, shape index: {}]
  %s1 = inlined_call_operand.vmem [shape: f32[36,32], index: 1, kind: input, shape index: {}]
  %s2 = inlined_call_operand.hbm [shape: f32[2,2,2,32], index: 2, kind: output, shape index: {}]
  %s3 = sld [smem:[#allocation0]]
  $region41: #{tpu_custom_call.1} parent=0
    _
  %s5 = ssub.s32 1, %s3
  %s6 = scalar_select 0, %s5, %s3
  $region1: #{tpu_custom_call.1} parent=0
    #allocation2 [shape = 'u8[2048]{0}', space=vmem, size = 0x800, scoped, tag = 'output window, operand 0']
    #allocation3 [shape = 's32[2]{0}', space=sflag, size = 0x8, scoped, tag = 'scoped memory for tpu_custom_call.1']
    %7 = vsyncpa [#allocation3], 0
    %s8 = scalar_lea.sflag [#allocation3], 1
    %9 = vsyncpa %s8, 0
    loop: start=0, step=1, limit=6
    $region2: #{tpu_custom_call.1} parent=1 // loop_pre_header
      _
    $region3: #{tpu_custom_call.1} parent=1 // loop_header
      %s11 = sphi 0, %s15
      %p12 = scmp.ge.s32.totalorder %s11, 6
      %s18 = sphi 0, %s30
      %s19 = sphi 0, %s26
      %s20 = sphi 0, %s18
      %s21 = sphi 0, %s19
      %s22 = sphi 0, %s20
      %s23 = sphi 0, %s21
      %s33 = sphi 0, %s35
      %s36 = sphi 0, %s33
      %s37 = sphi 0, %s36
      %s53 = sphi 0, %s37
      %s57 = sphi 0, %s57
      %s59 = sphi 0, %s57
      %s60 = sphi 0, %s59
      %s74 = sphi 0, %s60
      %s82 = sphi 0, %s84
      %s85 = sphi 0, %s82
      %s86 = sphi 0, %s85
      %s102 = sphi 0, %s86
    $region4: #{tpu_custom_call.1} parent=1 // loop_header_branch
      %14 = sbr.rel (%p12) target = $region8
    $region5: #{tpu_custom_call.1} parent=1 // loop_body
      %s16 = ssub.s32 %s11, 1
      %s17 = ssub.s32 %s11, 2
      %s24 = sadd.s32 1, %s19
      %p25 = scmp.ge.s32.totalorder %s24, 2
      %s26 = scalar_select %p25, 0, %s24
      %s27 = sadd.s32 1, %s18
      %s28 = scalar_select %p25, %s27, %s18
      %p29 = scmp.ge.s32.totalorder %s28, 2
      %s30 = scalar_select %p29, 0, %s28
      %s31 = ssub.s32 %s18, %s30
      %p32 = scmp.eq.s32.totalorder %s31, 0
      %s34 = sadd.s32 %s33, 1
      %s35 = scalar_select %p32, %s33, %s34
      %p38 = pneg %p32
      %p39 = scmp.eq.s32.totalorder %s11, 3
      %p40 = por %p38, %p39
      %p41 = scmp.ne.s32.totalorder %s33, %s36
      %p42 = scmp.eq.s32.totalorder %s11, 0
      %p43 = por %p41, %p42
      %p44 = scmp.ne.s32.totalorder %s33, %s36
      %p45 = scmp.eq.s32.totalorder %s16, 3
      %p46 = por %p44, %p45
      %p47 = scmp.ne.s32.totalorder %s36, %s37
      %p48 = scmp.eq.s32.totalorder %s16, 0
      %p49 = por %p47, %p48
      %p50 = scmp.ne.s32.totalorder %s36, %s37
      %p51 = scmp.eq.s32.totalorder %s17, 3
      %p52 = por %p50, %p51
      %p54 = scmp.ne.s32.totalorder %s37, %s53
      %p55 = scmp.eq.s32.totalorder %s17, 0
      %p56 = por %p54, %p55
      %s58 = sadd.s32 %s57, 1
      %p61 = scmp.eq.s32.totalorder %s11, 3
      %p62 = scmp.ne.s32.totalorder %s57, %s59
      %p63 = scmp.eq.s32.totalorder %s11, 0
      %p64 = por %p62, %p63
      %p65 = scmp.ne.s32.totalorder %s57, %s59
      %p66 = scmp.eq.s32.totalorder %s16, 3
      %p67 = por %p65, %p66
      %p68 = scmp.ne.s32.totalorder %s59, %s60
      %p69 = scmp.eq.s32.totalorder %s16, 0
      %p70 = por %p68, %p69
      %p71 = scmp.ne.s32.totalorder %s59, %s60
      %p72 = scmp.eq.s32.totalorder %s17, 3
      %p73 = por %p71, %p72
      %p75 = scmp.ne.s32.totalorder %s60, %s74
      %p76 = scmp.eq.s32.totalorder %s17, 0
      %p77 = por %p75, %p76
      %s78 = ssub.s32 %s18, %s30
      %s79 = ssub.s32 %s19, %s26
      %s80 = sor.u32 %s78, %s79
      %p81 = scmp.eq.s32.totalorder %s80, 0
      %s83 = sadd.s32 %s82, 1
      %s84 = scalar_select %p81, %s82, %s83
      %p87 = pneg %p81
      %p88 = scmp.eq.s32.totalorder %s11, 3
      %p89 = por %p87, %p88
      %p90 = scmp.ne.s32.totalorder %s82, %s85
      %p91 = scmp.eq.s32.totalorder %s11, 0
      %p92 = por %p90, %p91
      %p93 = scmp.ne.s32.totalorder %s82, %s85
      %p94 = scmp.eq.s32.totalorder %s16, 3
      %p95 = por %p93, %p94
      %p96 = scmp.ne.s32.totalorder %s85, %s86
      %p97 = scmp.eq.s32.totalorder %s16, 0
      %p98 = por %p96, %p97
      %p99 = scmp.ne.s32.totalorder %s85, %s86
      %p100 = scmp.eq.s32.totalorder %s17, 3
      %p101 = por %p99, %p100
      %p103 = scmp.ne.s32.totalorder %s86, %s102
      %p104 = scmp.eq.s32.totalorder %s17, 0
      %p105 = por %p103, %p104
      %p106 = scmp.le.s32.totalorder 1, %s11
      %p107 = scmp.lt.s32.totalorder %s11, 5
      %p108 = pnand %p106, %p107
      %p109 = pneg %p108
      // Predicated region
      $region9: #{tpu_custom_call.1} parent=5 // pred_check
        _
      $region10: #{tpu_custom_call.1} parent=5 // pred_check_branch
        %111 = sbr.rel (%p108) target = $region12
      $region11: #{tpu_custom_call.1} parent=5 // pred_region
        %s112 = ssub.s32 %s11, 1
        // Predicated region
        $region13: #{tpu_custom_call.1} parent=11 // pred_check
          %p113 = pneg %p70
        $region14: #{tpu_custom_call.1} parent=11 // pred_check_branch
          %115 = sbr.rel (%p113) target = $region16
        $region15: #{tpu_custom_call.1} parent=11 // pred_region
          _
        $region16: #{tpu_custom_call.1} parent=11 // pred_fallthru
          _
      $region12: #{tpu_custom_call.1} parent=5 // pred_fallthru
        _
      %p116 = scmp.lt.s32.totalorder %s11, 4
      // Predicated region
      $region17: #{tpu_custom_call.1} parent=5 // pred_check
        %p117 = pneg %p116
      $region18: #{tpu_custom_call.1} parent=5 // pred_check_branch
        %119 = sbr.rel (%p117) target = $region20
      $region19: #{tpu_custom_call.1} parent=5 // pred_region
        // Predicated region
        $region21: #{tpu_custom_call.1} parent=19 // pred_check
          %p120 = pneg %p43
        $region22: #{tpu_custom_call.1} parent=19 // pred_check_branch
          %122 = sbr.rel (%p120) target = $region24
        $region23: #{tpu_custom_call.1} parent=19 // pred_region
          %p123 = scmp.lt.s32.totalorder %s18, 1
          %s124 = scalar_select %p123, %s18, 1
          %s125 = smul.addr %s124, 54
          %s126 = smul.addr %s125, 8
          %s127 = scalar_lea.vmem %s0, %s126
        $region24: #{tpu_custom_call.1} parent=19 // pred_fallthru
          _
      $region20: #{tpu_custom_call.1} parent=5 // pred_fallthru
        _
      %p128 = scmp.le.s32.totalorder 1, %s11
      %p129 = scmp.lt.s32.totalorder %s11, 5
      %p130 = pnand %p128, %p129
      %p131 = pneg %p130
      // Predicated region
      $region25: #{tpu_custom_call.1} parent=5 // pred_check
        _
      $region26: #{tpu_custom_call.1} parent=5 // pred_check_branch
        %133 = sbr.rel (%p130) target = $region28
      $region27: #{tpu_custom_call.1} parent=5 // pred_region
        %s134 = ssub.s32 %s11, 1
        %p135 = scmp.lt.s32.totalorder %s20, 1
        %s136 = scalar_select %p135, %s20, 1
        %s137 = smul.addr %s136, 54
        %s138 = smul.addr %s137, 8
        %s139 = scalar_lea.vmem %s0, %s138
        %p140 = pneg %p49
        %p141 = pneg %p46
        %p142 = pneg %p70
        %p143 = pneg %p67
        %p144 = pneg %p98
        %p145 = pneg %p95
        %s146 = sand.u32 %s85, 1
        %s147 = scalar_lea.sflag [#allocation3], %s146
        %s148 = sand.u32 %s85, 1
        %s149 = smul.addr %s148, 2
        %s150 = scalar_lea.vmem [#allocation2], %s149
        %p151 = scmp.lt.s32.totalorder %s20, 1
        %s152 = scalar_select %p151, %s20, 1
        %s153 = smul.addr %s152, 54
        %s154 = smul.addr %s153, 8
        %s155 = scalar_lea.vmem %s0, %s154
        %s156 = smul.u32 %s21, 8
        %s157 = smul.u32 %s156, 24
        %s158 = scalar_lea.vmem %s155, %s157
        %v159 = vld [vmem:[%s158] sm:$0xff]
        %v160 = vld [vmem:[%s158 + $0x8] sm:$0xff]
        %v161 = vld [vmem:[%s158 + $0x10] sm:$0x3]
        %v162 = vld [vmem:[%s158 + $0x18] sm:$0xff]
        %v163 = vld [vmem:[%s158 + $0x20] sm:$0xff]
        %v164 = vld [vmem:[%s158 + $0x28] sm:$0x3]
        %v165 = vld [vmem:[%s158 + $0x30] sm:$0xff]
        %v166 = vld [vmem:[%s158 + $0x38] sm:$0xff]
        %v167 = vld [vmem:[%s158 + $0x40] sm:$0x3]
        %v168 = vld [vmem:[%s158 + $0x48] sm:$0xff]
        %v169 = vld [vmem:[%s158 + $0x50] sm:$0xff]
        %v170 = vld [vmem:[%s158 + $0x58] sm:$0x3]
        %v171 = vld [vmem:[%s158 + $0x60] sm:$0xff]
        %v172 = vld [vmem:[%s158 + $0x68] sm:$0xff]
        %v173 = vld [vmem:[%s158 + $0x70] sm:$0x3]
        %v174 = vld [vmem:[%s158 + $0x78] sm:$0xff]
        %v175 = vld [vmem:[%s158 + $0x80] sm:$0xff]
        %v176 = vld [vmem:[%s158 + $0x88] sm:$0x3]
        %v177 = vld [vmem:[%s158 + $0x90] sm:$0xff]
        %v178 = vld [vmem:[%s158 + $0x98] sm:$0xff]
        %v179 = vld [vmem:[%s158 + $0xa0] sm:$0x3]
        %v180 = vld [vmem:[%s158 + $0xa8] sm:$0xff]
        %v181 = vld [vmem:[%s158 + $0xb0] sm:$0xff]
        %v182 = vld [vmem:[%s158 + $0xb8] sm:$0x3]
        %v183 = vld [vmem:[%s158 + $0xc0] sm:$0xff]
        %v184 = vld [vmem:[%s158 + $0xc8] sm:$0xff]
        %v185 = vld [vmem:[%s158 + $0xd0] sm:$0x3]
        %v186 = vld [vmem:[%s158 + $0xd8] sm:$0xff]
        %v187 = vld [vmem:[%s158 + $0xe0] sm:$0xff]
        %v188 = vld [vmem:[%s158 + $0xe8] sm:$0x3]
        %vm213 = vcmask 1046528
        %v214 = vrot.slane %v159, 1
        %v215 = vrot.slane %v160, 1
        %v216 = vsel %vm213, %v214, %v215
        %v217 = vrot.slane %v161, 1
        %v218 = vsel %vm213, %v215, %v217
        %v219 = vrot.slane %v162, 1
        %v220 = vrot.slane %v163, 1
        %v221 = vsel %vm213, %v219, %v220
        %v222 = vrot.slane %v164, 1
        %v223 = vsel %vm213, %v220, %v222
        %v224 = vrot.slane %v165, 1
        %v225 = vrot.slane %v166, 1
        %v226 = vsel %vm213, %v224, %v225
        %v227 = vrot.slane %v167, 1
        %v228 = vsel %vm213, %v225, %v227
        %v229 = vrot.slane %v168, 1
        %v230 = vrot.slane %v169, 1
        %v231 = vsel %vm213, %v229, %v230
        %v232 = vrot.slane %v170, 1
        %v233 = vsel %vm213, %v230, %v232
        %v234 = vrot.slane %v171, 1
        %v235 = vrot.slane %v172, 1
        %v236 = vsel %vm213, %v234, %v235
        %v237 = vrot.slane %v173, 1
        %v238 = vsel %vm213, %v235, %v237
        %v239 = vrot.slane %v174, 1
        %v240 = vrot.slane %v175, 1
        %v241 = vsel %vm213, %v239, %v240
        %v242 = vrot.slane %v176, 1
        %v243 = vsel %vm213, %v240, %v242
        %v244 = vrot.slane %v177, 1
        %v245 = vrot.slane %v178, 1
        %v246 = vsel %vm213, %v244, %v245
        %v247 = vrot.slane %v179, 1
        %v248 = vsel %vm213, %v245, %v247
        %v249 = vrot.slane %v180, 1
        %v250 = vrot.slane %v181, 1
        %v251 = vsel %vm213, %v249, %v250
        %v252 = vrot.slane %v182, 1
        %v253 = vsel %vm213, %v250, %v252
        %vm254 = vcmask 1045504
        %v255 = vrot.slane %v159, 2
        %v256 = vrot.slane %v160, 2
        %v257 = vsel %vm254, %v255, %v256
        %v258 = vrot.slane %v161, 2
        %v259 = vsel %vm254, %v256, %v258
        %v260 = vrot.slane %v162, 2
        %v261 = vrot.slane %v163, 2
        %v262 = vsel %vm254, %v260, %v261
        %v263 = vrot.slane %v164, 2
        %v264 = vsel %vm254, %v261, %v263
        %v265 = vrot.slane %v165, 2
        %v266 = vrot.slane %v166, 2
        %v267 = vsel %vm254, %v265, %v266
        %v268 = vrot.slane %v167, 2
        %v269 = vsel %vm254, %v266, %v268
        %v270 = vrot.slane %v168, 2
        %v271 = vrot.slane %v169, 2
        %v272 = vsel %vm254, %v270, %v271
        %v273 = vrot.slane %v170, 2
        %v274 = vsel %vm254, %v271, %v273
        %v275 = vrot.slane %v171, 2
        %v276 = vrot.slane %v172, 2
        %v277 = vsel %vm254, %v275, %v276
        %v278 = vrot.slane %v173, 2
        %v279 = vsel %vm254, %v276, %v278
        %v280 = vrot.slane %v174, 2
        %v281 = vrot.slane %v175, 2
        %v282 = vsel %vm254, %v280, %v281
        %v283 = vrot.slane %v176, 2
        %v284 = vsel %vm254, %v281, %v283
        %v285 = vrot.slane %v177, 2
        %v286 = vrot.slane %v178, 2
        %v287 = vsel %vm254, %v285, %v286
        %v288 = vrot.slane %v179, 2
        %v289 = vsel %vm254, %v286, %v288
        %v290 = vrot.slane %v180, 2
        %v291 = vrot.slane %v181, 2
        %v292 = vsel %vm254, %v290, %v291
        %v293 = vrot.slane %v182, 2
        %v294 = vsel %vm254, %v291, %v293
        %v298 = vrot.slane %v183, 1
        %v299 = vrot.slane %v184, 1
        %v300 = vsel %vm213, %v298, %v299
        %v301 = vrot.slane %v185, 1
        %v302 = vsel %vm213, %v299, %v301
        %v303 = vrot.slane %v183, 2
        %v304 = vrot.slane %v184, 2
        %v305 = vsel %vm254, %v303, %v304
        %v306 = vrot.slane %v185, 2
        %v307 = vsel %vm254, %v304, %v306
        %v311 = vrot.slane %v186, 1
        %v312 = vrot.slane %v187, 1
        %v313 = vsel %vm213, %v311, %v312
        %v314 = vrot.slane %v188, 1
        %v315 = vsel %vm213, %v312, %v314
        %v316 = vrot.slane %v186, 2
        %v317 = vrot.slane %v187, 2
        %v318 = vsel %vm254, %v316, %v317
        %v319 = vrot.slane %v188, 2
        %v320 = vsel %vm254, %v317, %v319
        %321 = vrot.lane.b32.xlu0 %v216, 4
        %v322 = vpop.permute.xlu0 %321
        %323 = vrot.lane.b32.xlu0 %v218, 4
        %v324 = vpop.permute.xlu0 %323
        %325 = vrot.lane.b32.xlu0 %v221, 4
        %v326 = vpop.permute.xlu0 %325
        %327 = vrot.lane.b32.xlu0 %v223, 4
        %v328 = vpop.permute.xlu0 %327
        %329 = vrot.lane.b32.xlu0 %v226, 4
        %v330 = vpop.permute.xlu0 %329
        %331 = vrot.lane.b32.xlu0 %v228, 4
        %v332 = vpop.permute.xlu0 %331
        %333 = vrot.lane.b32.xlu0 %v231, 4
        %v334 = vpop.permute.xlu0 %333
        %335 = vrot.lane.b32.xlu0 %v233, 4
        %v336 = vpop.permute.xlu0 %335
        %337 = vrot.lane.b32.xlu0 %v236, 4
        %v338 = vpop.permute.xlu0 %337
        %339 = vrot.lane.b32.xlu0 %v238, 4
        %v340 = vpop.permute.xlu0 %339
        %341 = vrot.lane.b32.xlu0 %v241, 4
        %v342 = vpop.permute.xlu0 %341
        %343 = vrot.lane.b32.xlu0 %v243, 4
        %v344 = vpop.permute.xlu0 %343
        %345 = vrot.lane.b32.xlu0 %v246, 4
        %v346 = vpop.permute.xlu0 %345
        %347 = vrot.lane.b32.xlu0 %v248, 4
        %v348 = vpop.permute.xlu0 %347
        %349 = vrot.lane.b32.xlu0 %v251, 4
        %v350 = vpop.permute.xlu0 %349
        %351 = vrot.lane.b32.xlu0 %v253, 4
        %v352 = vpop.permute.xlu0 %351
        %369 = vrot.lane.b32.xlu0 %v257, 8
        %v370 = vpop.permute.xlu0 %369
        %371 = vrot.lane.b32.xlu0 %v259, 8
        %v372 = vpop.permute.xlu0 %371
        %373 = vrot.lane.b32.xlu0 %v262, 8
        %v374 = vpop.permute.xlu0 %373
        %375 = vrot.lane.b32.xlu0 %v264, 8
        %v376 = vpop.permute.xlu0 %375
        %377 = vrot.lane.b32.xlu0 %v267, 8
        %v378 = vpop.permute.xlu0 %377
        %379 = vrot.lane.b32.xlu0 %v269, 8
        %v380 = vpop.permute.xlu0 %379
        %381 = vrot.lane.b32.xlu0 %v272, 8
        %v382 = vpop.permute.xlu0 %381
        %383 = vrot.lane.b32.xlu0 %v274, 8
        %v384 = vpop.permute.xlu0 %383
        %385 = vrot.lane.b32.xlu0 %v277, 8
        %v386 = vpop.permute.xlu0 %385
        %387 = vrot.lane.b32.xlu0 %v279, 8
        %v388 = vpop.permute.xlu0 %387
        %389 = vrot.lane.b32.xlu0 %v282, 8
        %v390 = vpop.permute.xlu0 %389
        %391 = vrot.lane.b32.xlu0 %v284, 8
        %v392 = vpop.permute.xlu0 %391
        %393 = vrot.lane.b32.xlu0 %v287, 8
        %v394 = vpop.permute.xlu0 %393
        %395 = vrot.lane.b32.xlu0 %v289, 8
        %v396 = vpop.permute.xlu0 %395
        %397 = vrot.lane.b32.xlu0 %v292, 8
        %v398 = vpop.permute.xlu0 %397
        %399 = vrot.lane.b32.xlu0 %v294, 8
        %v400 = vpop.permute.xlu0 %399
        %417 = vrot.lane.b32.xlu0 %v162, 12
        %v418 = vpop.permute.xlu0 %417
        %419 = vrot.lane.b32.xlu0 %v163, 12
        %v420 = vpop.permute.xlu0 %419
        %421 = vrot.lane.b32.xlu0 %v165, 12
        %v422 = vpop.permute.xlu0 %421
        %423 = vrot.lane.b32.xlu0 %v166, 12
        %v424 = vpop.permute.xlu0 %423
        %425 = vrot.lane.b32.xlu0 %v168, 12
        %v426 = vpop.permute.xlu0 %425
        %427 = vrot.lane.b32.xlu0 %v169, 12
        %v428 = vpop.permute.xlu0 %427
        %429 = vrot.lane.b32.xlu0 %v171, 12
        %v430 = vpop.permute.xlu0 %429
        %431 = vrot.lane.b32.xlu0 %v172, 12
        %v432 = vpop.permute.xlu0 %431
        %433 = vrot.lane.b32.xlu0 %v174, 12
        %v434 = vpop.permute.xlu0 %433
        %435 = vrot.lane.b32.xlu0 %v175, 12
        %v436 = vpop.permute.xlu0 %435
        %437 = vrot.lane.b32.xlu0 %v177, 12
        %v438 = vpop.permute.xlu0 %437
        %439 = vrot.lane.b32.xlu0 %v178, 12
        %v440 = vpop.permute.xlu0 %439
        %441 = vrot.lane.b32.xlu0 %v180, 12
        %v442 = vpop.permute.xlu0 %441
        %443 = vrot.lane.b32.xlu0 %v181, 12
        %v444 = vpop.permute.xlu0 %443
        %445 = vrot.lane.b32.xlu0 %v183, 12
        %v446 = vpop.permute.xlu0 %445
        %447 = vrot.lane.b32.xlu0 %v184, 12
        %v448 = vpop.permute.xlu0 %447
        %465 = vrot.lane.b32.xlu0 %v221, 16
        %v466 = vpop.permute.xlu0 %465
        %467 = vrot.lane.b32.xlu0 %v223, 16
        %v468 = vpop.permute.xlu0 %467
        %469 = vrot.lane.b32.xlu0 %v226, 16
        %v470 = vpop.permute.xlu0 %469
        %471 = vrot.lane.b32.xlu0 %v228, 16
        %v472 = vpop.permute.xlu0 %471
        %473 = vrot.lane.b32.xlu0 %v231, 16
        %v474 = vpop.permute.xlu0 %473
        %475 = vrot.lane.b32.xlu0 %v233, 16
        %v476 = vpop.permute.xlu0 %475
        %477 = vrot.lane.b32.xlu0 %v236, 16
        %v478 = vpop.permute.xlu0 %477
        %479 = vrot.lane.b32.xlu0 %v238, 16
        %v480 = vpop.permute.xlu0 %479
        %481 = vrot.lane.b32.xlu0 %v241, 16
        %v482 = vpop.permute.xlu0 %481
        %483 = vrot.lane.b32.xlu0 %v243, 16
        %v484 = vpop.permute.xlu0 %483
        %485 = vrot.lane.b32.xlu0 %v246, 16
        %v486 = vpop.permute.xlu0 %485
        %487 = vrot.lane.b32.xlu0 %v248, 16
        %v488 = vpop.permute.xlu0 %487
        %489 = vrot.lane.b32.xlu0 %v251, 16
        %v490 = vpop.permute.xlu0 %489
        %491 = vrot.lane.b32.xlu0 %v253, 16
        %v492 = vpop.permute.xlu0 %491
        %493 = vrot.lane.b32.xlu0 %v300, 16
        %v494 = vpop.permute.xlu0 %493
        %495 = vrot.lane.b32.xlu0 %v302, 16
        %v496 = vpop.permute.xlu0 %495
        %513 = vrot.lane.b32.xlu0 %v262, 20
        %v514 = vpop.permute.xlu0 %513
        %515 = vrot.lane.b32.xlu0 %v264, 20
        %v516 = vpop.permute.xlu0 %515
        %517 = vrot.lane.b32.xlu0 %v267, 20
        %v518 = vpop.permute.xlu0 %517
        %519 = vrot.lane.b32.xlu0 %v269, 20
        %v520 = vpop.permute.xlu0 %519
        %521 = vrot.lane.b32.xlu0 %v272, 20
        %v522 = vpop.permute.xlu0 %521
        %523 = vrot.lane.b32.xlu0 %v274, 20
        %v524 = vpop.permute.xlu0 %523
        %525 = vrot.lane.b32.xlu0 %v277, 20
        %v526 = vpop.permute.xlu0 %525
        %527 = vrot.lane.b32.xlu0 %v279, 20
        %v528 = vpop.permute.xlu0 %527
        %529 = vrot.lane.b32.xlu0 %v282, 20
        %v530 = vpop.permute.xlu0 %529
        %531 = vrot.lane.b32.xlu0 %v284, 20
        %v532 = vpop.permute.xlu0 %531
        %533 = vrot.lane.b32.xlu0 %v287, 20
        %v534 = vpop.permute.xlu0 %533
        %535 = vrot.lane.b32.xlu0 %v289, 20
        %v536 = vpop.permute.xlu0 %535
        %537 = vrot.lane.b32.xlu0 %v292, 20
        %v538 = vpop.permute.xlu0 %537
        %539 = vrot.lane.b32.xlu0 %v294, 20
        %v540 = vpop.permute.xlu0 %539
        %541 = vrot.lane.b32.xlu0 %v305, 20
        %v542 = vpop.permute.xlu0 %541
        %543 = vrot.lane.b32.xlu0 %v307, 20
        %v544 = vpop.permute.xlu0 %543
        %561 = vrot.lane.b32.xlu0 %v165, 24
        %v562 = vpop.permute.xlu0 %561
        %563 = vrot.lane.b32.xlu0 %v166, 24
        %v564 = vpop.permute.xlu0 %563
        %565 = vrot.lane.b32.xlu0 %v168, 24
        %v566 = vpop.permute.xlu0 %565
        %567 = vrot.lane.b32.xlu0 %v169, 24
        %v568 = vpop.permute.xlu0 %567
        %569 = vrot.lane.b32.xlu0 %v171, 24
        %v570 = vpop.permute.xlu0 %569
        %571 = vrot.lane.b32.xlu0 %v172, 24
        %v572 = vpop.permute.xlu0 %571
        %573 = vrot.lane.b32.xlu0 %v174, 24
        %v574 = vpop.permute.xlu0 %573
        %575 = vrot.lane.b32.xlu0 %v175, 24
        %v576 = vpop.permute.xlu0 %575
        %577 = vrot.lane.b32.xlu0 %v177, 24
        %v578 = vpop.permute.xlu0 %577
        %579 = vrot.lane.b32.xlu0 %v178, 24
        %v580 = vpop.permute.xlu0 %579
        %581 = vrot.lane.b32.xlu0 %v180, 24
        %v582 = vpop.permute.xlu0 %581
        %583 = vrot.lane.b32.xlu0 %v181, 24
        %v584 = vpop.permute.xlu0 %583
        %585 = vrot.lane.b32.xlu0 %v183, 24
        %v586 = vpop.permute.xlu0 %585
        %587 = vrot.lane.b32.xlu0 %v184, 24
        %v588 = vpop.permute.xlu0 %587
        %589 = vrot.lane.b32.xlu0 %v186, 24
        %v590 = vpop.permute.xlu0 %589
        %591 = vrot.lane.b32.xlu0 %v187, 24
        %v592 = vpop.permute.xlu0 %591
        %609 = vrot.lane.b32.xlu0 %v226, 28
        %v610 = vpop.permute.xlu0 %609
        %611 = vrot.lane.b32.xlu0 %v228, 28
        %v612 = vpop.permute.xlu0 %611
        %613 = vrot.lane.b32.xlu0 %v231, 28
        %v614 = vpop.permute.xlu0 %613
        %615 = vrot.lane.b32.xlu0 %v233, 28
        %v616 = vpop.permute.xlu0 %615
        %617 = vrot.lane.b32.xlu0 %v236, 28
        %v618 = vpop.permute.xlu0 %617
        %619 = vrot.lane.b32.xlu0 %v238, 28
        %v620 = vpop.permute.xlu0 %619
        %621 = vrot.lane.b32.xlu0 %v241, 28
        %v622 = vpop.permute.xlu0 %621
        %623 = vrot.lane.b32.xlu0 %v243, 28
        %v624 = vpop.permute.xlu0 %623
        %625 = vrot.lane.b32.xlu0 %v246, 28
        %v626 = vpop.permute.xlu0 %625
        %627 = vrot.lane.b32.xlu0 %v248, 28
        %v628 = vpop.permute.xlu0 %627
        %629 = vrot.lane.b32.xlu0 %v251, 28
        %v630 = vpop.permute.xlu0 %629
        %631 = vrot.lane.b32.xlu0 %v253, 28
        %v632 = vpop.permute.xlu0 %631
        %633 = vrot.lane.b32.xlu0 %v300, 28
        %v634 = vpop.permute.xlu0 %633
        %635 = vrot.lane.b32.xlu0 %v302, 28
        %v636 = vpop.permute.xlu0 %635
        %637 = vrot.lane.b32.xlu0 %v313, 28
        %v638 = vpop.permute.xlu0 %637
        %639 = vrot.lane.b32.xlu0 %v315, 28
        %v640 = vpop.permute.xlu0 %639
        %657 = vrot.lane.b32.xlu0 %v267, 32
        %v658 = vpop.permute.xlu0 %657
        %659 = vrot.lane.b32.xlu0 %v269, 32
        %v660 = vpop.permute.xlu0 %659
        %661 = vrot.lane.b32.xlu0 %v272, 32
        %v662 = vpop.permute.xlu0 %661
        %663 = vrot.lane.b32.xlu0 %v274, 32
        %v664 = vpop.permute.xlu0 %663
        %665 = vrot.lane.b32.xlu0 %v277, 32
        %v666 = vpop.permute.xlu0 %665
        %667 = vrot.lane.b32.xlu0 %v279, 32
        %v668 = vpop.permute.xlu0 %667
        %669 = vrot.lane.b32.xlu0 %v282, 32
        %v670 = vpop.permute.xlu0 %669
        %671 = vrot.lane.b32.xlu0 %v284, 32
        %v672 = vpop.permute.xlu0 %671
        %673 = vrot.lane.b32.xlu0 %v287, 32
        %v674 = vpop.permute.xlu0 %673
        %675 = vrot.lane.b32.xlu0 %v289, 32
        %v676 = vpop.permute.xlu0 %675
        %677 = vrot.lane.b32.xlu0 %v292, 32
        %v678 = vpop.permute.xlu0 %677
        %679 = vrot.lane.b32.xlu0 %v294, 32
        %v680 = vpop.permute.xlu0 %679
        %681 = vrot.lane.b32.xlu0 %v305, 32
        %v682 = vpop.permute.xlu0 %681
        %683 = vrot.lane.b32.xlu0 %v307, 32
        %v684 = vpop.permute.xlu0 %683
        %685 = vrot.lane.b32.xlu0 %v318, 32
        %v686 = vpop.permute.xlu0 %685
        %687 = vrot.lane.b32.xlu0 %v320, 32
        %v688 = vpop.permute.xlu0 %687
        %vm705 = vcmask 31744
        %v706 = vsel %vm705, %v159, %v322
        %v707 = vsel %vm705, %v160, %v324
        %v708 = vsel %vm705, %v162, %v326
        %v709 = vsel %vm705, %v163, %v328
        %v710 = vsel %vm705, %v165, %v330
        %v711 = vsel %vm705, %v166, %v332
        %v712 = vsel %vm705, %v168, %v334
        %v713 = vsel %vm705, %v169, %v336
        %v714 = vsel %vm705, %v171, %v338
        %v715 = vsel %vm705, %v172, %v340
        %v716 = vsel %vm705, %v174, %v342
        %v717 = vsel %vm705, %v175, %v344
        %v718 = vsel %vm705, %v177, %v346
        %v719 = vsel %vm705, %v178, %v348
        %v720 = vsel %vm705, %v180, %v350
        %v721 = vsel %vm705, %v181, %v352
        %vm722 = vcmask 64512
        %v723 = vsel %vm722, %v706, %v370
        %v724 = vsel %vm722, %v707, %v372
        %v725 = vsel %vm722, %v708, %v374
        %v726 = vsel %vm722, %v709, %v376
        %v727 = vsel %vm722, %v710, %v378
        %v728 = vsel %vm722, %v711, %v380
        %v729 = vsel %vm722, %v712, %v382
        %v730 = vsel %vm722, %v713, %v384
        %v731 = vsel %vm722, %v714, %v386
        %v732 = vsel %vm722, %v715, %v388
        %v733 = vsel %vm722, %v716, %v390
        %v734 = vsel %vm722, %v717, %v392
        %v735 = vsel %vm722, %v718, %v394
        %v736 = vsel %vm722, %v719, %v396
        %v737 = vsel %vm722, %v720, %v398
        %v738 = vsel %vm722, %v721, %v400
        %vm739 = vcmask 97280
        %v740 = vsel %vm739, %v723, %v418
        %v741 = vsel %vm739, %v724, %v420
        %v742 = vsel %vm739, %v725, %v422
        %v743 = vsel %vm739, %v726, %v424
        %v744 = vsel %vm739, %v727, %v426
        %v745 = vsel %vm739, %v728, %v428
        %v746 = vsel %vm739, %v729, %v430
        %v747 = vsel %vm739, %v730, %v432
        %v748 = vsel %vm739, %v731, %v434
        %v749 = vsel %vm739, %v732, %v436
        %v750 = vsel %vm739, %v733, %v438
        %v751 = vsel %vm739, %v734, %v440
        %v752 = vsel %vm739, %v735, %v442
        %v753 = vsel %vm739, %v736, %v444
        %v754 = vsel %vm739, %v737, %v446
        %v755 = vsel %vm739, %v738, %v448
        %vm756 = vcmask 130048
        %v757 = vsel %vm756, %v740, %v466
        %v758 = vsel %vm756, %v741, %v468
        %v759 = vsel %vm756, %v742, %v470
        %v760 = vsel %vm756, %v743, %v472
        %v761 = vsel %vm756, %v744, %v474
        %v762 = vsel %vm756, %v745, %v476
        %v763 = vsel %vm756, %v746, %v478
        %v764 = vsel %vm756, %v747, %v480
        %v765 = vsel %vm756, %v748, %v482
        %v766 = vsel %vm756, %v749, %v484
        %v767 = vsel %vm756, %v750, %v486
        %v768 = vsel %vm756, %v751, %v488
        %v769 = vsel %vm756, %v752, %v490
        %v770 = vsel %vm756, %v753, %v492
        %v771 = vsel %vm756, %v754, %v494
        %v772 = vsel %vm756, %v755, %v496
        %vm773 = vcmask 162816
        %v774 = vsel %vm773, %v757, %v514
        %v775 = vsel %vm773, %v758, %v516
        %v776 = vsel %vm773, %v759, %v518
        %v777 = vsel %vm773, %v760, %v520
        %v778 = vsel %vm773, %v761, %v522
        %v779 = vsel %vm773, %v762, %v524
        %v780 = vsel %vm773, %v763, %v526
        %v781 = vsel %vm773, %v764, %v528
        %v782 = vsel %vm773, %v765, %v530
        %v783 = vsel %vm773, %v766, %v532
        %v784 = vsel %vm773, %v767, %v534
        %v785 = vsel %vm773, %v768, %v536
        %v786 = vsel %vm773, %v769, %v538
        %v787 = vsel %vm773, %v770, %v540
        %v788 = vsel %vm773, %v771, %v542
        %v789 = vsel %vm773, %v772, %v544
        %vm790 = vcmask 195584
        %v791 = vsel %vm790, %v774, %v562
        %v792 = vsel %vm790, %v775, %v564
        %v793 = vsel %vm790, %v776, %v566
        %v794 = vsel %vm790, %v777, %v568
        %v795 = vsel %vm790, %v778, %v570
        %v796 = vsel %vm790, %v779, %v572
        %v797 = vsel %vm790, %v780, %v574
        %v798 = vsel %vm790, %v781, %v576
        %v799 = vsel %vm790, %v782, %v578
        %v800 = vsel %vm790, %v783, %v580
        %v801 = vsel %vm790, %v784, %v582
        %v802 = vsel %vm790, %v785, %v584
        %v803 = vsel %vm790, %v786, %v586
        %v804 = vsel %vm790, %v787, %v588
        %v805 = vsel %vm790, %v788, %v590
        %v806 = vsel %vm790, %v789, %v592
        %vm807 = vcmask 228352
        %v808 = vsel %vm807, %v791, %v610
        %v809 = vsel %vm807, %v792, %v612
        %v810 = vsel %vm807, %v793, %v614
        %v811 = vsel %vm807, %v794, %v616
        %v812 = vsel %vm807, %v795, %v618
        %v813 = vsel %vm807, %v796, %v620
        %v814 = vsel %vm807, %v797, %v622
        %v815 = vsel %vm807, %v798, %v624
        %v816 = vsel %vm807, %v799, %v626
        %v817 = vsel %vm807, %v800, %v628
        %v818 = vsel %vm807, %v801, %v630
        %v819 = vsel %vm807, %v802, %v632
        %v820 = vsel %vm807, %v803, %v634
        %v821 = vsel %vm807, %v804, %v636
        %v822 = vsel %vm807, %v805, %v638
        %v823 = vsel %vm807, %v806, %v640
        %vm824 = vcmask 261120
        %v825 = vsel %vm824, %v808, %v658
        %v826 = vsel %vm824, %v809, %v660
        %v827 = vsel %vm824, %v810, %v662
        %v828 = vsel %vm824, %v811, %v664
        %v829 = vsel %vm824, %v812, %v666
        %v830 = vsel %vm824, %v813, %v668
        %v831 = vsel %vm824, %v814, %v670
        %v832 = vsel %vm824, %v815, %v672
        %v833 = vsel %vm824, %v816, %v674
        %v834 = vsel %vm824, %v817, %v676
        %v835 = vsel %vm824, %v818, %v678
        %v836 = vsel %vm824, %v819, %v680
        %v837 = vsel %vm824, %v820, %v682
        %v838 = vsel %vm824, %v821, %v684
        %v839 = vsel %vm824, %v822, %v686
        %v840 = vsel %vm824, %v823, %v688
        %v841 = vld [vmem:[%s1] sm:$0xff]
        %v842 = vld [vmem:[%s1 + $0x8] sm:$0xff]
        %v843 = vld [vmem:[%s1 + $0x10] sm:$0xff]
        %v844 = vld [vmem:[%s1 + $0x18] sm:$0xff]
        %v845 = vld [vmem:[%s1 + $0x20] sm:$0xf]
        %vm846 = vcmask 293888
        %v848 = vsel %vm846, %v825, 0
        %v851 = vsel %vm846, %v826, 0
        %v854 = vsel %vm846, %v827, 0
        %v857 = vsel %vm846, %v828, 0
        %v860 = vsel %vm846, %v829, 0
        %v863 = vsel %vm846, %v830, 0
        %v866 = vsel %vm846, %v831, 0
        %v869 = vsel %vm846, %v832, 0
        %v872 = vsel %vm846, %v833, 0
        %v875 = vsel %vm846, %v834, 0
        %v878 = vsel %vm846, %v835, 0
        %v881 = vsel %vm846, %v836, 0
        %v884 = vsel %vm846, %v837, 0
        %v887 = vsel %vm846, %v838, 0
        %v890 = vsel %vm846, %v839, 0
        %v893 = vsel %vm846, %v840, 0
        %vm895 = vcmask 1043456
        %v897 = vsel %vm895, %v845, 0
        %899 = vmatprep.subr.mxu0 0.0
        %900 = vmatpush1.msra.mxu0 0.0
        %901 = vmatprep.subr.mxu0 0.0
        %902 = vmatpush1.msra.mxu0 0.0
        %903 = vmatprep.subr.mxu0 0.0
        %904 = vmatpush1.msra.mxu0 0.0
        %905 = vmatprep.subr.mxu0 0.0
        %906 = vmatpush1.msra.mxu0 0.0
        %907 = vmatprep.subr.mxu0 0.0
        %908 = vmatpush1.msra.mxu0 0.0
        %909 = vmatprep.subr.mxu0 0.0
        %910 = vmatpush1.msra.mxu0 0.0
        %911 = vmatprep.subr.mxu0 0.0
        %912 = vmatpush1.msra.mxu0 0.0
        %913 = vmatprep.subr.mxu0 0.0
        %914 = vmatpush1.msra.mxu0 0.0
        %915 = vmatprep.subr.mxu0 0.0
        %916 = vmatpush1.msra.mxu0 0.0
        %917 = vmatprep.subr.mxu0 0.0
        %918 = vmatpush1.msra.mxu0 0.0
        %919 = vmatprep.subr.mxu0 0.0
        %920 = vmatpush1.msra.mxu0 0.0
        %921 = vmatprep.subr.mxu0 0.0
        %922 = vmatpush1.msra.mxu0 %v897
        %923 = vmatprep.subr.mxu0 0.0
        %924 = vmatpush1.msra.mxu0 %v844
        %925 = vmatprep.subr.mxu0 0.0
        %926 = vmatpush1.msra.mxu0 %v843
        %927 = vmatprep.subr.mxu0 0.0
        %928 = vmatpush1.msra.mxu0 %v842
        %929 = vmatprep.subr.mxu0 0.0
        %930 = vmatpush1.msra.mxu0 %v841
        %931 = vmatprep.subr.mxu0 0.0
        %932 = vmatpush2.msra.mxu0 0.0
        %933 = vmatprep.subr.mxu0 0.0
        %934 = vmatpush2.msra.mxu0 0.0
        %935 = vmatprep.subr.mxu0 0.0
        %936 = vmatpush2.msra.mxu0 0.0
        %937 = vmatprep.subr.mxu0 0.0
        %938 = vmatpush2.msra.mxu0 0.0
        %939 = vmatprep.subr.mxu0 0.0
        %940 = vmatpush2.msra.mxu0 0.0
        %941 = vmatprep.subr.mxu0 0.0
        %942 = vmatpush2.msra.mxu0 0.0
        %943 = vmatprep.subr.mxu0 0.0
        %944 = vmatpush2.msra.mxu0 0.0
        %945 = vmatprep.subr.mxu0 0.0
        %946 = vmatpush2.msra.mxu0 0.0
        %947 = vmatprep.subr.mxu0 0.0
        %948 = vmatpush2.msra.mxu0 0.0
        %949 = vmatprep.subr.mxu0 0.0
        %950 = vmatpush2.msra.mxu0 0.0
        %951 = vmatprep.subr.mxu0 0.0
        %952 = vmatpush2.msra.mxu0 0.0
        %953 = vmatprep.subr.mxu0 0.0
        %954 = vmatpush2.msra.mxu0 0.0
        %955 = vmatprep.subr.mxu0 0.0
        %956 = vmatpush2.msra.mxu0 0.0
        %957 = vmatprep.subr.mxu0 0.0
        %958 = vmatpush2.msra.mxu0 0.0
        %959 = vmatprep.subr.mxu0 0.0
        %960 = vmatpush2.msra.mxu0 0.0
        %961 = vmatprep.subr.mxu0 0.0
        %962 = vmatpush2.msra.mxu0 0.0
        %963 = vmatprep.mubr.f32.mxu0 0.0
        %964 = vmatmul.mubr.f32.gmra.mxu0 %v848
        %v965 = vpop.f32.mrf.mxu0
        %v966 = vadd.f32 0.0, %v965
        %v967 = vpop.f32.mrf.mxu0
        %968 = vmatprep.mubr.f32.mxu0 0.0
        %969 = vmatmul.mubr.f32.gmra.mxu0 %v851
        %v970 = vpop.f32.mrf.mxu0
        %v971 = vadd.f32 0.0, %v970
        %v972 = vpop.f32.mrf.mxu0
        %973 = vmatprep.mubr.f32.mxu0 0.0
        %974 = vmatmul.mubr.f32.gmra.mxu0 %v854
        %v975 = vpop.f32.mrf.mxu0
        %v976 = vadd.f32 0.0, %v975
        %v977 = vpop.f32.mrf.mxu0
        %978 = vmatprep.mubr.f32.mxu0 0.0
        %979 = vmatmul.mubr.f32.gmra.mxu0 %v857
        %v980 = vpop.f32.mrf.mxu0
        %v981 = vadd.f32 0.0, %v980
        %v982 = vpop.f32.mrf.mxu0
        %983 = vmatprep.mubr.f32.mxu0 0.0
        %984 = vmatmul.mubr.f32.gmra.mxu0 %v860
        %v985 = vpop.f32.mrf.mxu0
        %v986 = vadd.f32 0.0, %v985
        %v987 = vpop.f32.mrf.mxu0
        %988 = vmatprep.mubr.f32.mxu0 0.0
        %989 = vmatmul.mubr.f32.gmra.mxu0 %v863
        %v990 = vpop.f32.mrf.mxu0
        %v991 = vadd.f32 0.0, %v990
        %v992 = vpop.f32.mrf.mxu0
        %993 = vmatprep.mubr.f32.mxu0 0.0
        %994 = vmatmul.mubr.f32.gmra.mxu0 %v866
        %v995 = vpop.f32.mrf.mxu0
        %v996 = vadd.f32 0.0, %v995
        %v997 = vpop.f32.mrf.mxu0
        %998 = vmatprep.mubr.f32.mxu0 0.0
        %999 = vmatmul.mubr.f32.gmra.mxu0 %v869
        %v1000 = vpop.f32.mrf.mxu0
        %v1001 = vadd.f32 0.0, %v1000
        %v1002 = vpop.f32.mrf.mxu0
        %1003 = vmatprep.mubr.f32.mxu0 0.0
        %1004 = vmatmul.mubr.f32.gmra.mxu0 %v872
        %v1005 = vpop.f32.mrf.mxu0
        %v1006 = vadd.f32 0.0, %v1005
        %v1007 = vpop.f32.mrf.mxu0
        %1008 = vmatprep.mubr.f32.mxu0 0.0
        %1009 = vmatmul.mubr.f32.gmra.mxu0 %v875
        %v1010 = vpop.f32.mrf.mxu0
        %v1011 = vadd.f32 0.0, %v1010
        %v1012 = vpop.f32.mrf.mxu0
        %1013 = vmatprep.mubr.f32.mxu0 0.0
        %1014 = vmatmul.mubr.f32.gmra.mxu0 %v878
        %v1015 = vpop.f32.mrf.mxu0
        %v1016 = vadd.f32 0.0, %v1015
        %v1017 = vpop.f32.mrf.mxu0
        %1018 = vmatprep.mubr.f32.mxu0 0.0
        %1019 = vmatmul.mubr.f32.gmra.mxu0 %v881
        %v1020 = vpop.f32.mrf.mxu0
        %v1021 = vadd.f32 0.0, %v1020
        %v1022 = vpop.f32.mrf.mxu0
        %1023 = vmatprep.mubr.f32.mxu0 0.0
        %1024 = vmatmul.mubr.f32.gmra.mxu0 %v884
        %v1025 = vpop.f32.mrf.mxu0
        %v1026 = vadd.f32 0.0, %v1025
        %v1027 = vpop.f32.mrf.mxu0
        %1028 = vmatprep.mubr.f32.mxu0 0.0
        %1029 = vmatmul.mubr.f32.gmra.mxu0 %v887
        %v1030 = vpop.f32.mrf.mxu0
        %v1031 = vadd.f32 0.0, %v1030
        %v1032 = vpop.f32.mrf.mxu0
        %1033 = vmatprep.mubr.f32.mxu0 0.0
        %1034 = vmatmul.mubr.f32.gmra.mxu0 %v890
        %v1035 = vpop.f32.mrf.mxu0
        %v1036 = vadd.f32 0.0, %v1035
        %v1037 = vpop.f32.mrf.mxu0
        %1038 = vmatprep.mubr.f32.mxu0 0.0
        %1039 = vmatmul.mubr.f32.gmra.mxu0 %v893
        %v1040 = vpop.f32.mrf.mxu0
        %v1041 = vadd.f32 0.0, %v1040
        %v1042 = vpop.f32.mrf.mxu0
        %1043 = vdwg.mxu0
        %v1044 = vsel %vm824, %v966, 0.0
        %v1045 = vsel %vm824, %v971, 0.0
        %v1046 = vadd.f32 %v1044, %v1045
        %v1047 = vsel %vm824, %v976, 0.0
        %v1048 = vadd.f32 %v1046, %v1047
        %v1049 = vsel %vm824, %v981, 0.0
        %v1050 = vadd.f32 %v1048, %v1049
        %v1051 = vsel %vm824, %v986, 0.0
        %v1052 = vadd.f32 %v1050, %v1051
        %v1053 = vsel %vm824, %v991, 0.0
        %v1054 = vadd.f32 %v1052, %v1053
        %v1055 = vsel %vm824, %v996, 0.0
        %v1056 = vadd.f32 %v1054, %v1055
        %v1057 = vsel %vm824, %v1001, 0.0
        %v1058 = vadd.f32 %v1056, %v1057
        %v1059 = vsel %vm824, %v1006, 0.0
        %v1060 = vadd.f32 %v1058, %v1059
        %v1061 = vsel %vm824, %v1011, 0.0
        %v1062 = vadd.f32 %v1060, %v1061
        %v1063 = vsel %vm824, %v1016, 0.0
        %v1064 = vadd.f32 %v1062, %v1063
        %v1065 = vsel %vm824, %v1021, 0.0
        %v1066 = vadd.f32 %v1064, %v1065
        %v1067 = vsel %vm824, %v1026, 0.0
        %v1068 = vadd.f32 %v1066, %v1067
        %v1069 = vsel %vm824, %v1031, 0.0
        %v1070 = vadd.f32 %v1068, %v1069
        %v1071 = vsel %vm824, %v1036, 0.0
        %v1072 = vadd.f32 %v1070, %v1071
        %v1073 = vsel %vm824, %v1041, 0.0
        %v1074 = vadd.f32 %v1072, %v1073
        %v1075 = vrot.slane %v1074, 4
        %v1076 = vadd.f32 %v1074, %v1075
        %v1077 = vrot.slane %v1076, 2
        %v1078 = vadd.f32 %v1076, %v1077
        %v1079 = vrot.slane %v1078, 1
        %v1080 = vadd.f32 %v1078, %v1079
        %vm1081 = vcmask 253952
        %1082 = vst.msk [vmem:[%s150] sm:$0x1] %vm1081, %v1080
        %v1083 = vmul.f32 %v966, %v966
        %v1084 = vmul.f32 %v971, %v971
        %v1085 = vmul.f32 %v976, %v976
        %v1086 = vmul.f32 %v981, %v981
        %v1087 = vmul.f32 %v986, %v986
        %v1088 = vmul.f32 %v991, %v991
        %v1089 = vmul.f32 %v996, %v996
        %v1090 = vmul.f32 %v1001, %v1001
        %v1091 = vmul.f32 %v1006, %v1006
        %v1092 = vmul.f32 %v1011, %v1011
        %v1093 = vmul.f32 %v1016, %v1016
        %v1094 = vmul.f32 %v1021, %v1021
        %v1095 = vmul.f32 %v1026, %v1026
        %v1096 = vmul.f32 %v1031, %v1031
        %v1097 = vmul.f32 %v1036, %v1036
        %v1098 = vmul.f32 %v1041, %v1041
        %v1099 = vsel %vm824, %v1083, 0.0
        %v1100 = vsel %vm824, %v1084, 0.0
        %v1101 = vadd.f32 %v1099, %v1100
        %v1102 = vsel %vm824, %v1085, 0.0
        %v1103 = vadd.f32 %v1101, %v1102
        %v1104 = vsel %vm824, %v1086, 0.0
        %v1105 = vadd.f32 %v1103, %v1104
        %v1106 = vsel %vm824, %v1087, 0.0
        %v1107 = vadd.f32 %v1105, %v1106
        %v1108 = vsel %vm824, %v1088, 0.0
        %v1109 = vadd.f32 %v1107, %v1108
        %v1110 = vsel %vm824, %v1089, 0.0
        %v1111 = vadd.f32 %v1109, %v1110
        %v1112 = vsel %vm824, %v1090, 0.0
        %v1113 = vadd.f32 %v1111, %v1112
        %v1114 = vsel %vm824, %v1091, 0.0
        %v1115 = vadd.f32 %v1113, %v1114
        %v1116 = vsel %vm824, %v1092, 0.0
        %v1117 = vadd.f32 %v1115, %v1116
        %v1118 = vsel %vm824, %v1093, 0.0
        %v1119 = vadd.f32 %v1117, %v1118
        %v1120 = vsel %vm824, %v1094, 0.0
        %v1121 = vadd.f32 %v1119, %v1120
        %v1122 = vsel %vm824, %v1095, 0.0
        %v1123 = vadd.f32 %v1121, %v1122
        %v1124 = vsel %vm824, %v1096, 0.0
        %v1125 = vadd.f32 %v1123, %v1124
        %v1126 = vsel %vm824, %v1097, 0.0
        %v1127 = vadd.f32 %v1125, %v1126
        %v1128 = vsel %vm824, %v1098, 0.0
        %v1129 = vadd.f32 %v1127, %v1128
        %v1130 = vrot.slane %v1129, 4
        %v1131 = vadd.f32 %v1129, %v1130
        %v1132 = vrot.slane %v1131, 2
        %v1133 = vadd.f32 %v1131, %v1132
        %v1134 = vrot.slane %v1133, 1
        %v1135 = vadd.f32 %v1133, %v1134
        %1136 = vst.msk [vmem:[%s150 + $0x1] sm:$0x1] %vm1081, %v1135
        %s1137 = sand.u32 %s85, 1
        %s1138 = scalar_lea.sflag [#allocation3], %s1137
        %s1139 = sand.u32 %s85, 1
        %s1140 = smul.addr %s1139, 2
        %s1141 = scalar_lea.vmem [#allocation2], %s1140
        // Predicated region
        $region29: #{tpu_custom_call.1} parent=27 // pred_check
          %p1142 = pneg %p95
        $region30: #{tpu_custom_call.1} parent=27 // pred_check_branch
          %1144 = sbr.rel (%p1142) target = $region32
        $region31: #{tpu_custom_call.1} parent=27 // pred_region
          %s1146 = ssub.s32 32, 32
          %1147 = vsyncadd %s1138, %s1146
          %s1148 = smul.addr %s20, 2
          %s1149 = sadd.s32 %s21, %s1148
          %s1150 = smul.addr %s1149, 32
          %s1151 = scalar_lea.hbm %s2, %s1150
          %s1153 = sshll.u32 %s1141, 4
          %s1154 = int_to_ptr.vmem [resolvable:$true] %s1153
          %1156 = dma.vmem_to_hbm [thread:$0]  %s1154, 32, %s1151, %s1138
        $region32: #{tpu_custom_call.1} parent=27 // pred_fallthru
          _
      $region28: #{tpu_custom_call.1} parent=5 // pred_fallthru
        _
      %p1157 = scmp.le.s32.totalorder 2, %s11
      // Predicated region
      $region33: #{tpu_custom_call.1} parent=5 // pred_check
        %p1158 = pneg %p1157
      $region34: #{tpu_custom_call.1} parent=5 // pred_check_branch
        %1160 = sbr.rel (%p1158) target = $region36
      $region35: #{tpu_custom_call.1} parent=5 // pred_region
        %s1161 = ssub.s32 %s11, 2
        // Predicated region
        $region37: #{tpu_custom_call.1} parent=35 // pred_check
          %p1162 = pneg %p101
        $region38: #{tpu_custom_call.1} parent=35 // pred_check_branch
          %1164 = sbr.rel (%p1162) target = $region40
        $region39: #{tpu_custom_call.1} parent=35 // pred_region
          %s1165 = sand.u32 %s86, 1
          %s1166 = scalar_lea.sflag [#allocation3], %s1165
          %s1167 = sand.u32 %s86, 1
          %s1168 = smul.addr %s1167, 2
          %s1169 = scalar_lea.vmem [#allocation2], %s1168
          %1170 = dma.done %s1166, 32
        $region40: #{tpu_custom_call.1} parent=35 // pred_fallthru
          _
      $region36: #{tpu_custom_call.1} parent=5 // pred_fallthru
        _
    $region6: #{tpu_custom_call.1} parent=1 // loop_footer
      %s15 = sadd.s32 1, %s11
    $region7: #{tpu_custom_call.1} parent=1 // loop_footer_branch
      %10 = sbr.rel target = $region3
    $region8: #{tpu_custom_call.1} parent=1 // loop_exit
      _
    %1171 = vsyncpa [#allocation3], 1
    %s1172 = scalar_lea.sflag [#allocation3], 1
    %1173 = vsyncpa %s1172, 1

</llo_original>
